<compile_context>
chip_gen: v6e
topology: v6e:2x2x1
jax: 0.10.0
libtpu: 0.0.40
codegen_flags: <defaults>
</compile_context>

<pallas_src>
import jax
import jax.numpy as jnp
from jax.experimental import pallas as pl
from jax.experimental.pallas import tpu as pltpu

_LANE = 128
_SUBLANE = 8


def _vmem_capacity_bytes():
    """Physical VMEM of the local chip; conservative (v7x) default if unknown."""
    try:
        return int(pltpu.get_tpu_info().vmem_capacity_bytes)
    except Exception:
        return 64 << 20


# ----------------------------------------------------------------------------
# Single-pass kernel: one (S, tile_c) block per grid step, full-S reduction on
# the sublane axis, per-column stats hoisted to a (1, tile_c) row.
# ----------------------------------------------------------------------------
def _normalize_kernel(x_ref, o_ref):
    x = x_ref[...].astype(jnp.float32)
    n = x.shape[0]
    mean = jnp.mean(x, axis=0, keepdims=True)                       # (1, tile_c)
    # torch.std default is unbiased (N-1); S == 1 -> inf/NaN, same as torch.
    var = jnp.sum((x - mean) * (x - mean), axis=0, keepdims=True) / jnp.float32(n - 1)
    inv_std = 1.0 / (jnp.sqrt(var) + jnp.float32(1e-6))             # eps on std
    # (x - mean) recomputed inline: bit-identical to the reference and avoids a
    # persistent full-block f32 temporary; divide hoisted to one reciprocal per
    # column, then a broadcast VPU multiply over the (S, tile_c) block.
    o_ref[...] = jnp.clip((x - mean) * inv_std, -100.0, 100.0).astype(o_ref.dtype)


def _normalize_single_pass(x2d, tile_c, vmem_limit, big_vmem):
    S, C = x2d.shape
    dtype_bytes = jnp.dtype(x2d.dtype).itemsize
    grid_c = pl.cdiv(C, tile_c)

    # Deeper buffering hides per-step DMA-issue latency for narrow tiles; only
    # where there is lots of VMEM (v5e/v6e) and enough steps to matter.
    if big_vmem and tile_c <= 2 * _LANE and grid_c >= 8:
        in_spec = pl.BlockSpec((S, tile_c), lambda j: (0, j),
                               pipeline_mode=pl.Buffered(3))
    else:
        in_spec = pl.BlockSpec((S, tile_c), lambda j: (0, j))

    return pl.pallas_call(
        _normalize_kernel,
        out_shape=jax.ShapeDtypeStruct((S, C), x2d.dtype),
        grid=(grid_c,),
        in_specs=[in_spec],
        out_specs=pl.BlockSpec((S, tile_c), lambda j: (0, j)),
        compiler_params=pltpu.CompilerParams(
            # Independent columns -> megacore-splittable on v7x (2 TCs);
            # measured neutral on single-TC v5e/v6e.
            dimension_semantics=("parallel",),
            vmem_limit_bytes=vmem_limit,
        ),
        cost_estimate=pl.CostEstimate(
            flops=6 * S * C,
            transcendentals=C,
            bytes_accessed=2 * S * C * dtype_bytes,
        ),
    )(x2d)


# ----------------------------------------------------------------------------
# Two-pass fallback for long S (full-S column block no longer fits VMEM).
# Pass 1: accumulate per-column sum / sum-of-squares over S tiles -> (2, C)
#         stats (row 0 = mean, row 1 = 1/(std + eps)).
# Pass 2: stream scale/shift + clip over (S, C).
# ----------------------------------------------------------------------------
def _make_stats_kernel(n_rows):
    def _stats_kernel(x_ref, stats_ref, sum_ref, sq_ref):
        si = pl.program_id(1)

        @pl.when(si == 0)
        def _():
            sum_ref[...] = jnp.zeros_like(sum_ref)
            sq_ref[...] = jnp.zeros_like(sq_ref)

        x = x_ref[...].astype(jnp.float32)
        tile_s = x.shape[0]
        # Ragged final S-block: the input DMA is clipped, leaving stale rows in
        # VMEM, so mask them out of the reduction.
        row = jax.lax.broadcasted_iota(jnp.int32, x.shape, 0)
        x = jnp.where(row < (n_rows - si * tile_s), x, 0.0)
        sum_ref[...] += jnp.sum(x, axis=0, keepdims=True)
        sq_ref[...] += jnp.sum(x * x, axis=0, keepdims=True)

        @pl.when(si == pl.num_programs(1) - 1)
        def _():
            n = jnp.float32(n_rows)
            mean = sum_ref[...] / n
            # Single-pass E[x^2] - E[x]^2 form; clamp tiny negative round-off.
            var = jnp.maximum((sq_ref[...] - n * mean * mean) / (n - 1.0), 0.0)
            stats_ref[0:1, :] = mean
            stats_ref[1:2, :] = 1.0 / (jnp.sqrt(var) + jnp.float32(1e-6))

    return _stats_kernel


def _apply_kernel(x_ref, stats_ref, o_ref):
    x = x_ref[...].astype(jnp.float32)
    mean = stats_ref[0:1, :]
    inv_std = stats_ref[1:2, :]
    o_ref[...] = jnp.clip((x - mean) * inv_std, -100.0, 100.0).astype(o_ref.dtype)


def _normalize_two_pass(x2d, tile_s, tile_c, vmem_limit):
    S, C = x2d.shape
    dtype_bytes = jnp.dtype(x2d.dtype).itemsize
    grid_c = pl.cdiv(C, tile_c)
    grid_s = pl.cdiv(S, tile_s)

    stats = pl.pallas_call(
        _make_stats_kernel(S),
        out_shape=jax.ShapeDtypeStruct((2, C), jnp.float32),
        grid=(grid_c, grid_s),                       # reduction axis (S) last
        in_specs=[pl.BlockSpec((tile_s, tile_c), lambda c, s: (s, c))],
        out_specs=pl.BlockSpec((2, tile_c), lambda c, s: (0, c)),
        scratch_shapes=[pltpu.VMEM((1, tile_c), jnp.float32),
                        pltpu.VMEM((1, tile_c), jnp.float32)],
        compiler_params=pltpu.CompilerParams(
            dimension_semantics=("parallel", "arbitrary"),
            vmem_limit_bytes=vmem_limit,
        ),
        cost_estimate=pl.CostEstimate(
            flops=3 * S * C,
            transcendentals=C,
            bytes_accessed=S * C * dtype_bytes,
        ),
    )(x2d)

    return pl.pallas_call(
        _apply_kernel,
        out_shape=jax.ShapeDtypeStruct((S, C), x2d.dtype),
        grid=(grid_c, grid_s),
        in_specs=[pl.BlockSpec((tile_s, tile_c), lambda c, s: (s, c)),
                  pl.BlockSpec((2, tile_c), lambda c, s: (0, c))],
        out_specs=pl.BlockSpec((tile_s, tile_c), lambda c, s: (s, c)),
        compiler_params=pltpu.CompilerParams(
            dimension_semantics=("parallel", "parallel"),
            vmem_limit_bytes=vmem_limit,
        ),
        cost_estimate=pl.CostEstimate(
            flops=3 * S * C,
            transcendentals=0,
            bytes_accessed=2 * S * C * dtype_bytes,
        ),
    )(x2d, stats)


# ----------------------------------------------------------------------------
# Wrapper
# ----------------------------------------------------------------------------
def normalization_activation(x, *, tile_c=None, tile_s=None, two_pass=None,
                             block_budget_bytes=None):
    """normalize_data(x) for x of shape (S, B, F); reduction over dim 0."""
    S, B, F = x.shape
    C = B * F
    dtype_bytes = jnp.dtype(x.dtype).itemsize

    # Free (metadata-only) flatten of the non-reduced dims onto the lane axis.
    x2d = x.reshape(S, C)

    vmem_cap = _vmem_capacity_bytes()
    big_vmem = vmem_cap >= (96 << 20)            # v5e/v6e: 128 MiB; v7x: 64 MiB
    if block_budget_bytes is None:
        block_budget_bytes = (32 << 20) if big_vmem else (12 << 20)
    vmem_limit = (96 << 20) if big_vmem else (40 << 20)

    c128 = pl.cdiv(C, _LANE) * _LANE

    # Per lane column, the single-pass kernel needs:
    #   2 (double-buffer) x 2 (in+out) x S x dtype_bytes   DMA buffers
    # + ~2 x S x 4                                         f32 compute temps
    per_lane_bytes = S * (4 * dtype_bytes + 2 * 4)
    max_tile = (block_budget_bytes // per_lane_bytes) // _LANE * _LANE

    if two_pass is None:
        two_pass = (tile_c is None) and (max_tile < _LANE)

    if two_pass:
        if tile_c is None:
            tile_c = C if C <= _LANE else int(min(c128, 4 * _LANE))
        if tile_s is None:
            per_row = tile_c * (4 * dtype_bytes + 2 * 4)
            tile_s = max(_SUBLANE,
                         (block_budget_bytes // per_row) // _SUBLANE * _SUBLANE)
            tile_s = int(min(tile_s, pl.cdiv(S, _SUBLANE) * _SUBLANE))
        out2d = _normalize_two_pass(x2d, tile_s, tile_c, vmem_limit)
        return out2d.reshape(S, B, F)

    if tile_c is None:
        if C <= _LANE:
            tile_c = C                           # single block, full lane dim
        else:
            tile_c = int(min(c128, max(_LANE, max_tile)))
            # Guarantee >= 2 lane-grid steps: lets v7x's two TensorCores both
            # stream, and overlaps DMA/compute even on 1-TC chips.
            if tile_c >= c128 and c128 >= 2 * _LANE:
                tile_c = (c128 // 2 + _LANE - 1) // _LANE * _LANE

    out2d = _normalize_single_pass(x2d, tile_c, vmem_limit, big_vmem)
    return out2d.reshape(S, B, F)


def _reference(x):
    xf = x.astype(jnp.float32)
    mean = jnp.mean(xf, axis=0)
    std = jnp.std(xf, axis=0, ddof=1) + 1e-6
    return jnp.clip((xf - mean) / std, -100.0, 100.0).astype(x.dtype)


if __name__ == "__main__":
    k1, k2, k3, k4 = jax.random.split(jax.random.PRNGKey(0), 4)

    # 1) Shape implied by the module: (seq, batch, hidden); reduction over seq.
    S, B, F = 8, 2, 32
    x = jax.random.normal(k1, (S, B, F), dtype=jnp.float32) * 3.0 + 1.5
    out = jax.block_until_ready(normalization_activation(x))
    assert out.shape == (S, B, F)
    assert jnp.allclose(out, _reference(x), atol=1e-5, rtol=1e-5)

    # 2) Ragged lane grid (C=300, tile_c=128 -> grid=(3,), masked edge block;
    #    no wrapper pad/slice).
    x2 = jax.random.normal(k2, (16, 3, 100), dtype=jnp.float32) * 0.5 - 2.0
    out2 = jax.block_until_ready(normalization_activation(x2, tile_c=128))
    assert out2.shape == (16, 3, 100)
    assert jnp.allclose(out2, _reference(x2), atol=1e-5, rtol=1e-5)

    # 3) Auto tiling with the >=2-step clamp (C=512 -> tile_c=256, grid=(2,)).
    x3 = jax.random.normal(k3, (8, 4, 128), dtype=jnp.float32)
    out3 = jax.block_until_ready(normalization_activation(x3))
    assert jnp.allclose(out3, _reference(x3), atol=1e-5, rtol=1e-5)

    # 4) Long-S two-pass fallback (forced small tiles: ragged rows AND lanes).
    x4 = jax.random.normal(k4, (20, 2, 80), dtype=jnp.float32) * 2.0 + 0.5
    out4 = jax.block_until_ready(
        normalization_activation(x4, two_pass=True, tile_s=8, tile_c=128))
    assert out4.shape == (20, 2, 80)
    assert jnp.allclose(out4, _reference(x4), atol=1e-4, rtol=1e-4)

    print("KERNEL_OK")
</pallas_src>

<mosaic_0001>
module attributes {stable_mosaic.version = 11 : i64} {
  func.func @_normalize_kernel(%arg0: i32, %arg1: memref<8x64xf32, #tpu.memory_space<vmem>>, %arg2: memref<8x64xf32, #tpu.memory_space<vmem>>) attributes {dimension_semantics = [#tpu.dimension_semantics<parallel>], iteration_bounds = array<i64: 1>, scalar_prefetch = 0 : i64, scratch_operands = 0 : i64, tpu.core_type = #tpu.core_type<tc>, window_params = [{transform_indices = @transform_0, window_bounds = array<i64: 8, 64>}, {transform_indices = @transform_1, window_bounds = array<i64: 8, 64>}]} {
    %c0 = arith.constant 0 : index
    %c0_0 = arith.constant 0 : index
    %0 = vector.load %arg1[%c0, %c0_0] : memref<8x64xf32, #tpu.memory_space<vmem>>, vector<8x64xf32>
    %cst = arith.constant dense<0.000000e+00> : vector<64xf32>
    %1 = vector.multi_reduction <add>, %0, %cst [0] : vector<8x64xf32> to vector<64xf32>
    %2 = vector.shape_cast %1 : vector<64xf32> to vector<1x64xf32>
    %cst_1 = arith.constant 8.000000e+00 : f32
    %3 = vector.broadcast %cst_1 : f32 to vector<1x64xf32>
    %4 = arith.divf %2, %3 : vector<1x64xf32>
    %5 = vector.broadcast %4 : vector<1x64xf32> to vector<8x64xf32>
    %6 = arith.subf %0, %5 : vector<8x64xf32>
    %7 = vector.broadcast %4 : vector<1x64xf32> to vector<8x64xf32>
    %8 = arith.subf %0, %7 : vector<8x64xf32>
    %9 = arith.mulf %6, %8 : vector<8x64xf32>
    %cst_2 = arith.constant dense<0.000000e+00> : vector<64xf32>
    %10 = vector.multi_reduction <add>, %9, %cst_2 [0] : vector<8x64xf32> to vector<64xf32>
    %11 = vector.shape_cast %10 : vector<64xf32> to vector<1x64xf32>
    %cst_3 = arith.constant 7.000000e+00 : f32
    %12 = vector.broadcast %cst_3 : f32 to vector<1x64xf32>
    %13 = arith.divf %11, %12 : vector<1x64xf32>
    %14 = math.sqrt %13 : vector<1x64xf32>
    %cst_4 = arith.constant 9.99999997E-7 : f32
    %15 = vector.broadcast %cst_4 : f32 to vector<1x64xf32>
    %16 = arith.addf %14, %15 : vector<1x64xf32>
    %cst_5 = arith.constant 1.000000e+00 : f32
    %17 = vector.broadcast %cst_5 : f32 to vector<1x64xf32>
    %18 = arith.divf %17, %16 : vector<1x64xf32>
    %19 = vector.broadcast %4 : vector<1x64xf32> to vector<8x64xf32>
    %20 = arith.subf %0, %19 : vector<8x64xf32>
    %21 = vector.broadcast %18 : vector<1x64xf32> to vector<8x64xf32>
    %22 = arith.mulf %20, %21 : vector<8x64xf32>
    %cst_6 = arith.constant -1.000000e+02 : f32
    %cst_7 = arith.constant 1.000000e+02 : f32
    %23 = vector.broadcast %cst_6 : f32 to vector<8x64xf32>
    %24 = arith.maximumf %23, %22 : vector<8x64xf32>
    %25 = vector.broadcast %cst_7 : f32 to vector<8x64xf32>
    %26 = arith.minimumf %25, %24 : vector<8x64xf32>
    %c0_8 = arith.constant 0 : index
    %c0_9 = arith.constant 0 : index
    %27 = vector.load %arg2[%c0_8, %c0_9] : memref<8x64xf32, #tpu.memory_space<vmem>>, vector<8x64xf32>
    tpu.vector_store %arg2[%c0_8, %c0_9], %26 {strides = array<i32>} : memref<8x64xf32, #tpu.memory_space<vmem>>, vector<8x64xf32>,
    return
  }
  func.func @transform_0(%arg0: i32) -> (i32, i32) {
    %c0_i32 = arith.constant 0 : i32
    %c0_i32_0 = arith.constant 0 : i32
    return %c0_i32, %arg0 : i32, i32
  }
  func.func @transform_1(%arg0: i32) -> (i32, i32) {
    %c0_i32 = arith.constant 0 : i32
    %c0_i32_0 = arith.constant 0 : i32
    return %c0_i32, %arg0 : i32, i32
  }
}

</mosaic_0001>

<llo_original>
// kernel: tpu_custom_call.1
$region0: #{tpu_custom_call.1}
  #allocation0 [shape = 'u32[]', space=smem, size = 0x4, offset = 0x4, fixed_abs, tag = 'smem constant byte address 0x4 - core index']
  #allocation1 [shape = 'u32[144,128]{1,0:T(1,128)}', space=vmem, size = 0x12000, scoped, tag = 'internal scratch']
  %s0 = inlined_call_operand.hbm [shape: f32[8,64], index: 0, kind: input, shape index: {}]
  %s1 = inlined_call_operand.hbm [shape: f32[8,64], index: 1, kind: output, shape index: {}]
  %s2 = sld [smem:[#allocation0]]
  $region18: #{tpu_custom_call.1} parent=0
    _
  %s4 = ssub.s32 1, %s2
  %s5 = scalar_select 0, %s4, %s2
  $region1: #{tpu_custom_call.1} parent=0
    #allocation2 [shape = 'u8[4096]{0}', space=vmem, size = 0x1000, scoped, tag = 'input window, operand 0, single buffered']
    #allocation3 [shape = 's32[1]{0}', space=sflag, size = 0x4, scoped, tag = 'scoped memory for tpu_custom_call.1']
    #allocation4 [shape = 's32[1]{0}', space=sflag, size = 0x4, scoped, tag = 'scoped memory for tpu_custom_call.1']
    #allocation5 [shape = 'u8[4096]{0}', space=vmem, size = 0x1000, scoped, tag = 'output window, operand 0, single buffered']
    %6 = vsyncpa [#allocation3], 0
    %7 = vsyncpa [#allocation4], 0
    // Predicated region
    $region2: #{tpu_custom_call.1} parent=1 // pred_check
      _
    $region3: #{tpu_custom_call.1} parent=1 // pred_check_branch
      %9 = sbr.rel (0) target = $region5
    $region4: #{tpu_custom_call.1} parent=1 // pred_region
      %s11 = ssub.s32 128, 128
      %12 = vsyncadd [#allocation3], %s11
      %s14 = sshll.u32 [#allocation2], 4
      %s15 = int_to_ptr.vmem [resolvable:$true] %s14
      %17 = dma.hbm_to_vmem [thread:$0]  %s0, 128, %s15, [#allocation3]
    $region5: #{tpu_custom_call.1} parent=1 // pred_fallthru
      _
    // Predicated region
    $region6: #{tpu_custom_call.1} parent=1 // pred_check
      _
    $region7: #{tpu_custom_call.1} parent=1 // pred_check_branch
      %19 = sbr.rel (0) target = $region9
    $region8: #{tpu_custom_call.1} parent=1 // pred_region
      %20 = dma.done [#allocation3], 128
    $region9: #{tpu_custom_call.1} parent=1 // pred_fallthru
      _
    %v21 = vld [vmem:[#allocation2] sm:$0xff]
    %vm22 = vcmask 523264
    %v23 = vsel %vm22, %v21, 0.0
    %v24 = vrot.slane %v23, 4
    %v25 = vadd.f32 %v23, %v24
    %v26 = vrot.slane %v25, 2
    %v27 = vadd.f32 %v25, %v26
    %v28 = vrot.slane %v27, 1
    %v29 = vadd.f32 %v27, %v28
    %v30 = vrcp.pop 8.0
    %v31 = vmul.f32 %v29, %v30
    %v32 = vsub.f32 %v21, %v31
    %v33 = vmul.f32 %v32, %v32
    %v34 = vsel %vm22, %v33, 0.0
    %v35 = vrot.slane %v34, 4
    %v36 = vadd.f32 %v34, %v35
    %v37 = vrot.slane %v36, 2
    %v38 = vadd.f32 %v36, %v37
    %v39 = vrot.slane %v38, 1
    %v40 = vadd.f32 %v38, %v39
    %v41 = vrcp.pop 7.0
    %v42 = vmul.f32 %v40, %v41
    %v43 = vrsqrt.pop %v42
    %v44 = vmul.f32 %v42, %v43
    %vm45 = vcmp.eq.f32.partialorder %v42, inf
    %v46 = vsel %vm45, %v42, %v44
    %vm47 = vcmp.eq.f32.partialorder %v42, 0.0
    %v48 = vand.u32 %v42, 2147483648
    %v49 = vsel %vm47, %v48, %v46
    %v50 = vadd.f32 %v49, 1e-06
    %v51 = vrcp.pop %v50
    %v52 = vmul.f32 1.0, %v51
    %v53 = vmul.f32 %v32, %v52
    %v54 = vmax.f32 %v53, -100.0
    %v55 = vmin.f32 %v54, 100.0
    %56 = vst.msk [vmem:[#allocation5] sm:$0xff] %vm22, %v55
    // Predicated region
    $region10: #{tpu_custom_call.1} parent=1 // pred_check
      _
    $region11: #{tpu_custom_call.1} parent=1 // pred_check_branch
      %58 = sbr.rel (0) target = $region13
    $region12: #{tpu_custom_call.1} parent=1 // pred_region
      %s60 = ssub.s32 128, 128
      %61 = vsyncadd [#allocation4], %s60
      %s63 = sshll.u32 [#allocation5], 4
      %s64 = int_to_ptr.vmem [resolvable:$true] %s63
      %66 = dma.vmem_to_hbm [thread:$0]  %s64, 128, %s1, [#allocation4]
    $region13: #{tpu_custom_call.1} parent=1 // pred_fallthru
      _
    // Predicated region
    $region14: #{tpu_custom_call.1} parent=1 // pred_check
      _
    $region15: #{tpu_custom_call.1} parent=1 // pred_check_branch
      %68 = sbr.rel (0) target = $region17
    $region16: #{tpu_custom_call.1} parent=1 // pred_region
      %69 = dma.done [#allocation4], 128
    $region17: #{tpu_custom_call.1} parent=1 // pred_fallthru
      _
    %70 = vsyncpa [#allocation3], 1
    %71 = vsyncpa [#allocation4], 1

</llo_original>
